<compile_context>
chip_gen: v7x
topology: tpu7x:2x2x1
jax: 0.10.0
libtpu: 0.0.40
codegen_flags: <defaults>
</compile_context>

<pallas_src>
import jax
import jax.numpy as jnp
from jax import lax
from jax.experimental import pallas as pl
from jax.experimental.pallas import tpu as pltpu

# lrisModel feature sizes
IN_F, HID_F, OUT_F = 4, 6, 3
LANES = 128
SUB_ROWS = 16          # inner compute chunk (sublanes): 16x128 f32 slab = 2 vregs
MAX_TILE_ROWS = 512    # grid tile: 512*128 = 65536 batch rows (~1 MiB x tile)

# Flat SMEM parameter layout (f32 scalars):
W1_OFF = 0                        # w1[k, j] at W1_OFF + k*HID_F + j
B1_OFF = W1_OFF + IN_F * HID_F    # b1[j]
W2_OFF = B1_OFF + HID_F           # w2[j, m] at W2_OFF + j*OUT_F + m
B2_OFF = W2_OFF + HID_F * OUT_F   # b2[m]
P_LEN = B2_OFF + OUT_F            # 51
P_PAD = 64


def _cdiv(a, b):
    return -(-a // b)


def mlp_kernel(p_ref, x_ref, o_ref):
    """Fused Linear(4,6) -> Sigmoid -> Linear(6,3), batch-on-lanes.

    p_ref: (P_PAD,) f32 in SMEM  — packed w1/b1/w2/b2, read as scalars.
    x_ref: (4, RT, 128) f32      — x[k, r, l] = feature k of batch row r*128+l.
    o_ref: (3, RT, 128) f32      — o[m, r, l] = output m of batch row r*128+l.
    """
    # Hoist all 51 parameter scalar loads out of the compute loop.
    w1 = [[p_ref[W1_OFF + k * HID_F + j] for j in range(HID_F)] for k in range(IN_F)]
    b1 = [p_ref[B1_OFF + j] for j in range(HID_F)]
    w2 = [[p_ref[W2_OFF + j * OUT_F + m] for m in range(OUT_F)] for j in range(HID_F)]
    b2 = [p_ref[B2_OFF + m] for m in range(OUT_F)]

    rt = x_ref.shape[1]
    sub = SUB_ROWS if (rt >= SUB_ROWS and rt % SUB_ROWS == 0) else rt
    n_chunks = rt // sub

    def chunk(c, carry):
        r0 = pl.multiple_of(c * sub, sub)
        # Four fully dense (sub, 128) batch slabs, one per input feature.
        xs = [x_ref[k, pl.ds(r0, sub), :] for k in range(IN_F)]

        # Linear(4,6) + Sigmoid: scalar-broadcast MACs on the VPU, exp on the EUP.
        ss = []
        for j in range(HID_F):
            h = xs[0] * w1[0][j] + b1[j]
            for k in range(1, IN_F):
                h = h + xs[k] * w1[k][j]
            ss.append(jax.nn.sigmoid(h))

        # Linear(6,3): again scalar-broadcast MACs, one dense slab per output.
        for m in range(OUT_F):
            o = ss[0] * w2[0][m] + b2[m]
            for j in range(1, HID_F):
                o = o + ss[j] * w2[j][m]
            o_ref[m, pl.ds(r0, sub), :] = o.astype(o_ref.dtype)
        return carry

    lax.fori_loop(0, n_chunks, chunk, 0)


def pack_params(w1, b1, w2, b2):
    """Pack weights ((in,out) layout) and biases into one flat f32 SMEM vector."""
    flat = jnp.concatenate([
        jnp.asarray(w1, jnp.float32).reshape(-1),   # 24
        jnp.asarray(b1, jnp.float32).reshape(-1),   # 6
        jnp.asarray(w2, jnp.float32).reshape(-1),   # 18
        jnp.asarray(b2, jnp.float32).reshape(-1),   # 3
    ])
    return jnp.pad(flat, (0, P_PAD - P_LEN))


@jax.jit
def lris_forward(x, packed_params):
    """x: (B, 4) f32, packed_params: (64,) f32 -> (B, 3) f32."""
    B = x.shape[0]
    total_rows = max(1, _cdiv(B, LANES))           # batch in 128-lane row groups

    # Tile selection: fat tiles to amortize per-grid-step overhead; at least two
    # grid steps when there is enough work so both v7x TensorCores get a share.
    if total_rows >= 2 * SUB_ROWS:
        n_tiles = max(2, _cdiv(total_rows, MAX_TILE_ROWS))
        tile_rows = _cdiv(_cdiv(total_rows, n_tiles), SUB_ROWS) * SUB_ROWS
    else:
        n_tiles = 1
        tile_rows = total_rows
    rows_pad = max(n_tiles * tile_rows, _cdiv(total_rows, tile_rows) * tile_rows)
    b_pad = rows_pad * LANES

    # Single fused relayout pass: transpose (+ tail pad) + free contiguous reshape.
    xt = jnp.transpose(x.astype(jnp.float32))                 # (4, B)
    if b_pad != B:
        xt = jnp.pad(xt, ((0, 0), (0, b_pad - B)))
    xt = xt.reshape(IN_F, rows_pad, LANES)

    out = pl.pallas_call(
        mlp_kernel,
        out_shape=jax.ShapeDtypeStruct((OUT_F, rows_pad, LANES), jnp.float32),
        grid=(rows_pad // tile_rows,),
        in_specs=[
            pl.BlockSpec(memory_space=pltpu.MemorySpace.SMEM),            # params -> SMEM scalars
            pl.BlockSpec((IN_F, tile_rows, LANES), lambda i: (0, i, 0)),  # x tiles stream
        ],
        out_specs=pl.BlockSpec((OUT_F, tile_rows, LANES), lambda i: (0, i, 0)),
        compiler_params=pltpu.CompilerParams(
            dimension_semantics=("parallel",),
            vmem_limit_bytes=32 * 1024 * 1024,
        ),
    )(packed_params, xt)

    # (3, rows, 128) -> (3, b_pad) -> (B, 3): small fused pass (~12 B/row each way).
    return jnp.transpose(out.reshape(OUT_F, b_pad))[:B]


def init_params(key):
    """Deterministic init mimicking nn.Linear's uniform(-1/sqrt(fan_in))."""
    k1, k2, k3, k4 = jax.random.split(key, 4)
    bound1 = 1.0 / jnp.sqrt(float(IN_F))
    bound2 = 1.0 / jnp.sqrt(float(HID_F))
    # Stored as (in, out) — the transpose of PyTorch's (out, in) weight.
    w1 = jax.random.uniform(k1, (IN_F, HID_F), jnp.float32, -bound1, bound1)
    b1 = jax.random.uniform(k2, (HID_F,), jnp.float32, -bound1, bound1)
    w2 = jax.random.uniform(k3, (HID_F, OUT_F), jnp.float32, -bound2, bound2)
    b2 = jax.random.uniform(k4, (OUT_F,), jnp.float32, -bound2, bound2)
    return w1, b1, w2, b2


if __name__ == "__main__":
    key = jax.random.PRNGKey(0)
    kx, kp = jax.random.split(key)
    B = 8
    x = jax.random.normal(kx, (B, IN_F), jnp.float32)
    w1, b1, w2, b2 = init_params(kp)
    params = pack_params(w1, b1, w2, b2)

    out = jax.block_until_ready(lris_forward(x, params))

    # Reference: same math as the PyTorch module.
    ref = jax.nn.sigmoid(x @ w1 + b1) @ w2 + b2
    assert out.shape == (B, OUT_F)
    assert jnp.allclose(out, ref, atol=1e-5), "mismatch vs reference"

    print("KERNEL_OK")
</pallas_src>

<mosaic_0001>
module attributes {stable_mosaic.version = 11 : i64} {
  func.func @mlp_kernel(%arg0: i32, %arg1: memref<64xf32, #tpu.memory_space<smem>>, %arg2: memref<4x1x128xf32, #tpu.memory_space<vmem>>, %arg3: memref<3x1x128xf32, #tpu.memory_space<vmem>>) attributes {dimension_semantics = [#tpu.dimension_semantics<parallel>], iteration_bounds = array<i64: 1>, scalar_prefetch = 0 : i64, scratch_operands = 0 : i64, tpu.core_type = #tpu.core_type<tc>, window_params = [{transform_indices = @transform_0, window_bounds = array<i64: 64>}, {transform_indices = @transform_1, window_bounds = array<i64: 4, 1, 128>}, {transform_indices = @transform_2, window_bounds = array<i64: 3, 1, 128>}]} {
    %c0 = arith.constant 0 : index
    %0 = memref.load %arg1[%c0] : memref<64xf32, #tpu.memory_space<smem>>
    %c1 = arith.constant 1 : index
    %1 = memref.load %arg1[%c1] : memref<64xf32, #tpu.memory_space<smem>>
    %c2 = arith.constant 2 : index
    %2 = memref.load %arg1[%c2] : memref<64xf32, #tpu.memory_space<smem>>
    %c3 = arith.constant 3 : index
    %3 = memref.load %arg1[%c3] : memref<64xf32, #tpu.memory_space<smem>>
    %c4 = arith.constant 4 : index
    %4 = memref.load %arg1[%c4] : memref<64xf32, #tpu.memory_space<smem>>
    %c5 = arith.constant 5 : index
    %5 = memref.load %arg1[%c5] : memref<64xf32, #tpu.memory_space<smem>>
    %c6 = arith.constant 6 : index
    %6 = memref.load %arg1[%c6] : memref<64xf32, #tpu.memory_space<smem>>
    %c7 = arith.constant 7 : index
    %7 = memref.load %arg1[%c7] : memref<64xf32, #tpu.memory_space<smem>>
    %c8 = arith.constant 8 : index
    %8 = memref.load %arg1[%c8] : memref<64xf32, #tpu.memory_space<smem>>
    %c9 = arith.constant 9 : index
    %9 = memref.load %arg1[%c9] : memref<64xf32, #tpu.memory_space<smem>>
    %c10 = arith.constant 10 : index
    %10 = memref.load %arg1[%c10] : memref<64xf32, #tpu.memory_space<smem>>
    %c11 = arith.constant 11 : index
    %11 = memref.load %arg1[%c11] : memref<64xf32, #tpu.memory_space<smem>>
    %c12 = arith.constant 12 : index
    %12 = memref.load %arg1[%c12] : memref<64xf32, #tpu.memory_space<smem>>
    %c13 = arith.constant 13 : index
    %13 = memref.load %arg1[%c13] : memref<64xf32, #tpu.memory_space<smem>>
    %c14 = arith.constant 14 : index
    %14 = memref.load %arg1[%c14] : memref<64xf32, #tpu.memory_space<smem>>
    %c15 = arith.constant 15 : index
    %15 = memref.load %arg1[%c15] : memref<64xf32, #tpu.memory_space<smem>>
    %c16 = arith.constant 16 : index
    %16 = memref.load %arg1[%c16] : memref<64xf32, #tpu.memory_space<smem>>
    %c17 = arith.constant 17 : index
    %17 = memref.load %arg1[%c17] : memref<64xf32, #tpu.memory_space<smem>>
    %c18 = arith.constant 18 : index
    %18 = memref.load %arg1[%c18] : memref<64xf32, #tpu.memory_space<smem>>
    %c19 = arith.constant 19 : index
    %19 = memref.load %arg1[%c19] : memref<64xf32, #tpu.memory_space<smem>>
    %c20 = arith.constant 20 : index
    %20 = memref.load %arg1[%c20] : memref<64xf32, #tpu.memory_space<smem>>
    %c21 = arith.constant 21 : index
    %21 = memref.load %arg1[%c21] : memref<64xf32, #tpu.memory_space<smem>>
    %c22 = arith.constant 22 : index
    %22 = memref.load %arg1[%c22] : memref<64xf32, #tpu.memory_space<smem>>
    %c23 = arith.constant 23 : index
    %23 = memref.load %arg1[%c23] : memref<64xf32, #tpu.memory_space<smem>>
    %c24 = arith.constant 24 : index
    %24 = memref.load %arg1[%c24] : memref<64xf32, #tpu.memory_space<smem>>
    %c25 = arith.constant 25 : index
    %25 = memref.load %arg1[%c25] : memref<64xf32, #tpu.memory_space<smem>>
    %c26 = arith.constant 26 : index
    %26 = memref.load %arg1[%c26] : memref<64xf32, #tpu.memory_space<smem>>
    %c27 = arith.constant 27 : index
    %27 = memref.load %arg1[%c27] : memref<64xf32, #tpu.memory_space<smem>>
    %c28 = arith.constant 28 : index
    %28 = memref.load %arg1[%c28] : memref<64xf32, #tpu.memory_space<smem>>
    %c29 = arith.constant 29 : index
    %29 = memref.load %arg1[%c29] : memref<64xf32, #tpu.memory_space<smem>>
    %c30 = arith.constant 30 : index
    %30 = memref.load %arg1[%c30] : memref<64xf32, #tpu.memory_space<smem>>
    %c31 = arith.constant 31 : index
    %31 = memref.load %arg1[%c31] : memref<64xf32, #tpu.memory_space<smem>>
    %c32 = arith.constant 32 : index
    %32 = memref.load %arg1[%c32] : memref<64xf32, #tpu.memory_space<smem>>
    %c33 = arith.constant 33 : index
    %33 = memref.load %arg1[%c33] : memref<64xf32, #tpu.memory_space<smem>>
    %c34 = arith.constant 34 : index
    %34 = memref.load %arg1[%c34] : memref<64xf32, #tpu.memory_space<smem>>
    %c35 = arith.constant 35 : index
    %35 = memref.load %arg1[%c35] : memref<64xf32, #tpu.memory_space<smem>>
    %c36 = arith.constant 36 : index
    %36 = memref.load %arg1[%c36] : memref<64xf32, #tpu.memory_space<smem>>
    %c37 = arith.constant 37 : index
    %37 = memref.load %arg1[%c37] : memref<64xf32, #tpu.memory_space<smem>>
    %c38 = arith.constant 38 : index
    %38 = memref.load %arg1[%c38] : memref<64xf32, #tpu.memory_space<smem>>
    %c39 = arith.constant 39 : index
    %39 = memref.load %arg1[%c39] : memref<64xf32, #tpu.memory_space<smem>>
    %c40 = arith.constant 40 : index
    %40 = memref.load %arg1[%c40] : memref<64xf32, #tpu.memory_space<smem>>
    %c41 = arith.constant 41 : index
    %41 = memref.load %arg1[%c41] : memref<64xf32, #tpu.memory_space<smem>>
    %c42 = arith.constant 42 : index
    %42 = memref.load %arg1[%c42] : memref<64xf32, #tpu.memory_space<smem>>
    %c43 = arith.constant 43 : index
    %43 = memref.load %arg1[%c43] : memref<64xf32, #tpu.memory_space<smem>>
    %c44 = arith.constant 44 : index
    %44 = memref.load %arg1[%c44] : memref<64xf32, #tpu.memory_space<smem>>
    %c45 = arith.constant 45 : index
    %45 = memref.load %arg1[%c45] : memref<64xf32, #tpu.memory_space<smem>>
    %c46 = arith.constant 46 : index
    %46 = memref.load %arg1[%c46] : memref<64xf32, #tpu.memory_space<smem>>
    %c47 = arith.constant 47 : index
    %47 = memref.load %arg1[%c47] : memref<64xf32, #tpu.memory_space<smem>>
    %c48 = arith.constant 48 : index
    %48 = memref.load %arg1[%c48] : memref<64xf32, #tpu.memory_space<smem>>
    %c49 = arith.constant 49 : index
    %49 = memref.load %arg1[%c49] : memref<64xf32, #tpu.memory_space<smem>>
    %c50 = arith.constant 50 : index
    %50 = memref.load %arg1[%c50] : memref<64xf32, #tpu.memory_space<smem>>
    %c0_i32 = arith.constant 0 : i32
    %c1_i32 = arith.constant 1 : i32
    %51 = arith.muli %c0_i32, %c1_i32 : i32
    %52 = tpu.assume_multiple %51, 1 : i32
    %c0_0 = arith.constant 0 : index
    %53 = arith.index_cast %52 : i32 to index
    %c0_1 = arith.constant 0 : index
    %54 = vector.load %arg2[%c0_0, %53, %c0_1] : memref<4x1x128xf32, #tpu.memory_space<vmem>>, vector<1x1x128xf32>
    %55 = vector.shape_cast %54 : vector<1x1x128xf32> to vector<1x128xf32>
    %c1_2 = arith.constant 1 : index
    %56 = arith.index_cast %52 : i32 to index
    %c0_3 = arith.constant 0 : index
    %57 = vector.load %arg2[%c1_2, %56, %c0_3] : memref<4x1x128xf32, #tpu.memory_space<vmem>>, vector<1x1x128xf32>
    %58 = vector.shape_cast %57 : vector<1x1x128xf32> to vector<1x128xf32>
    %c2_4 = arith.constant 2 : index
    %59 = arith.index_cast %52 : i32 to index
    %c0_5 = arith.constant 0 : index
    %60 = vector.load %arg2[%c2_4, %59, %c0_5] : memref<4x1x128xf32, #tpu.memory_space<vmem>>, vector<1x1x128xf32>
    %61 = vector.shape_cast %60 : vector<1x1x128xf32> to vector<1x128xf32>
    %c3_6 = arith.constant 3 : index
    %62 = arith.index_cast %52 : i32 to index
    %c0_7 = arith.constant 0 : index
    %63 = vector.load %arg2[%c3_6, %62, %c0_7] : memref<4x1x128xf32, #tpu.memory_space<vmem>>, vector<1x1x128xf32>
    %64 = vector.shape_cast %63 : vector<1x1x128xf32> to vector<1x128xf32>
    %65 = vector.broadcast %0 : f32 to vector<1x128xf32>
    %66 = arith.mulf %55, %65 : vector<1x128xf32>
    %67 = vector.broadcast %24 : f32 to vector<1x128xf32>
    %68 = arith.addf %66, %67 : vector<1x128xf32>
    %69 = vector.broadcast %6 : f32 to vector<1x128xf32>
    %70 = arith.mulf %58, %69 : vector<1x128xf32>
    %71 = arith.addf %68, %70 : vector<1x128xf32>
    %72 = vector.broadcast %12 : f32 to vector<1x128xf32>
    %73 = arith.mulf %61, %72 : vector<1x128xf32>
    %74 = arith.addf %71, %73 : vector<1x128xf32>
    %75 = vector.broadcast %18 : f32 to vector<1x128xf32>
    %76 = arith.mulf %64, %75 : vector<1x128xf32>
    %77 = arith.addf %74, %76 : vector<1x128xf32>
    %78 = arith.negf %77 : vector<1x128xf32>
    %79 = math.exp %78 : vector<1x128xf32>
    %cst = arith.constant 1.000000e+00 : f32
    %80 = vector.broadcast %cst : f32 to vector<1x128xf32>
    %81 = arith.addf %80, %79 : vector<1x128xf32>
    %82 = arith.divf %80, %81 : vector<1x128xf32>
    %83 = vector.broadcast %1 : f32 to vector<1x128xf32>
    %84 = arith.mulf %55, %83 : vector<1x128xf32>
    %85 = vector.broadcast %25 : f32 to vector<1x128xf32>
    %86 = arith.addf %84, %85 : vector<1x128xf32>
    %87 = vector.broadcast %7 : f32 to vector<1x128xf32>
    %88 = arith.mulf %58, %87 : vector<1x128xf32>
    %89 = arith.addf %86, %88 : vector<1x128xf32>
    %90 = vector.broadcast %13 : f32 to vector<1x128xf32>
    %91 = arith.mulf %61, %90 : vector<1x128xf32>
    %92 = arith.addf %89, %91 : vector<1x128xf32>
    %93 = vector.broadcast %19 : f32 to vector<1x128xf32>
    %94 = arith.mulf %64, %93 : vector<1x128xf32>
    %95 = arith.addf %92, %94 : vector<1x128xf32>
    %96 = arith.negf %95 : vector<1x128xf32>
    %97 = math.exp %96 : vector<1x128xf32>
    %cst_8 = arith.constant 1.000000e+00 : f32
    %98 = vector.broadcast %cst_8 : f32 to vector<1x128xf32>
    %99 = arith.addf %98, %97 : vector<1x128xf32>
    %100 = arith.divf %98, %99 : vector<1x128xf32>
    %101 = vector.broadcast %2 : f32 to vector<1x128xf32>
    %102 = arith.mulf %55, %101 : vector<1x128xf32>
    %103 = vector.broadcast %26 : f32 to vector<1x128xf32>
    %104 = arith.addf %102, %103 : vector<1x128xf32>
    %105 = vector.broadcast %8 : f32 to vector<1x128xf32>
    %106 = arith.mulf %58, %105 : vector<1x128xf32>
    %107 = arith.addf %104, %106 : vector<1x128xf32>
    %108 = vector.broadcast %14 : f32 to vector<1x128xf32>
    %109 = arith.mulf %61, %108 : vector<1x128xf32>
    %110 = arith.addf %107, %109 : vector<1x128xf32>
    %111 = vector.broadcast %20 : f32 to vector<1x128xf32>
    %112 = arith.mulf %64, %111 : vector<1x128xf32>
    %113 = arith.addf %110, %112 : vector<1x128xf32>
    %114 = arith.negf %113 : vector<1x128xf32>
    %115 = math.exp %114 : vector<1x128xf32>
    %cst_9 = arith.constant 1.000000e+00 : f32
    %116 = vector.broadcast %cst_9 : f32 to vector<1x128xf32>
    %117 = arith.addf %116, %115 : vector<1x128xf32>
    %118 = arith.divf %116, %117 : vector<1x128xf32>
    %119 = vector.broadcast %3 : f32 to vector<1x128xf32>
    %120 = arith.mulf %55, %119 : vector<1x128xf32>
    %121 = vector.broadcast %27 : f32 to vector<1x128xf32>
    %122 = arith.addf %120, %121 : vector<1x128xf32>
    %123 = vector.broadcast %9 : f32 to vector<1x128xf32>
    %124 = arith.mulf %58, %123 : vector<1x128xf32>
    %125 = arith.addf %122, %124 : vector<1x128xf32>
    %126 = vector.broadcast %15 : f32 to vector<1x128xf32>
    %127 = arith.mulf %61, %126 : vector<1x128xf32>
    %128 = arith.addf %125, %127 : vector<1x128xf32>
    %129 = vector.broadcast %21 : f32 to vector<1x128xf32>
    %130 = arith.mulf %64, %129 : vector<1x128xf32>
    %131 = arith.addf %128, %130 : vector<1x128xf32>
    %132 = arith.negf %131 : vector<1x128xf32>
    %133 = math.exp %132 : vector<1x128xf32>
    %cst_10 = arith.constant 1.000000e+00 : f32
    %134 = vector.broadcast %cst_10 : f32 to vector<1x128xf32>
    %135 = arith.addf %134, %133 : vector<1x128xf32>
    %136 = arith.divf %134, %135 : vector<1x128xf32>
    %137 = vector.broadcast %4 : f32 to vector<1x128xf32>
    %138 = arith.mulf %55, %137 : vector<1x128xf32>
    %139 = vector.broadcast %28 : f32 to vector<1x128xf32>
    %140 = arith.addf %138, %139 : vector<1x128xf32>
    %141 = vector.broadcast %10 : f32 to vector<1x128xf32>
    %142 = arith.mulf %58, %141 : vector<1x128xf32>
    %143 = arith.addf %140, %142 : vector<1x128xf32>
    %144 = vector.broadcast %16 : f32 to vector<1x128xf32>
    %145 = arith.mulf %61, %144 : vector<1x128xf32>
    %146 = arith.addf %143, %145 : vector<1x128xf32>
    %147 = vector.broadcast %22 : f32 to vector<1x128xf32>
    %148 = arith.mulf %64, %147 : vector<1x128xf32>
    %149 = arith.addf %146, %148 : vector<1x128xf32>
    %150 = arith.negf %149 : vector<1x128xf32>
    %151 = math.exp %150 : vector<1x128xf32>
    %cst_11 = arith.constant 1.000000e+00 : f32
    %152 = vector.broadcast %cst_11 : f32 to vector<1x128xf32>
    %153 = arith.addf %152, %151 : vector<1x128xf32>
    %154 = arith.divf %152, %153 : vector<1x128xf32>
    %155 = vector.broadcast %5 : f32 to vector<1x128xf32>
    %156 = arith.mulf %55, %155 : vector<1x128xf32>
    %157 = vector.broadcast %29 : f32 to vector<1x128xf32>
    %158 = arith.addf %156, %157 : vector<1x128xf32>
    %159 = vector.broadcast %11 : f32 to vector<1x128xf32>
    %160 = arith.mulf %58, %159 : vector<1x128xf32>
    %161 = arith.addf %158, %160 : vector<1x128xf32>
    %162 = vector.broadcast %17 : f32 to vector<1x128xf32>
    %163 = arith.mulf %61, %162 : vector<1x128xf32>
    %164 = arith.addf %161, %163 : vector<1x128xf32>
    %165 = vector.broadcast %23 : f32 to vector<1x128xf32>
    %166 = arith.mulf %64, %165 : vector<1x128xf32>
    %167 = arith.addf %164, %166 : vector<1x128xf32>
    %168 = arith.negf %167 : vector<1x128xf32>
    %169 = math.exp %168 : vector<1x128xf32>
    %cst_12 = arith.constant 1.000000e+00 : f32
    %170 = vector.broadcast %cst_12 : f32 to vector<1x128xf32>
    %171 = arith.addf %170, %169 : vector<1x128xf32>
    %172 = arith.divf %170, %171 : vector<1x128xf32>
    %173 = vector.broadcast %30 : f32 to vector<1x128xf32>
    %174 = arith.mulf %82, %173 : vector<1x128xf32>
    %175 = vector.broadcast %48 : f32 to vector<1x128xf32>
    %176 = arith.addf %174, %175 : vector<1x128xf32>
    %177 = vector.broadcast %33 : f32 to vector<1x128xf32>
    %178 = arith.mulf %100, %177 : vector<1x128xf32>
    %179 = arith.addf %176, %178 : vector<1x128xf32>
    %180 = vector.broadcast %36 : f32 to vector<1x128xf32>
    %181 = arith.mulf %118, %180 : vector<1x128xf32>
    %182 = arith.addf %179, %181 : vector<1x128xf32>
    %183 = vector.broadcast %39 : f32 to vector<1x128xf32>
    %184 = arith.mulf %136, %183 : vector<1x128xf32>
    %185 = arith.addf %182, %184 : vector<1x128xf32>
    %186 = vector.broadcast %42 : f32 to vector<1x128xf32>
    %187 = arith.mulf %154, %186 : vector<1x128xf32>
    %188 = arith.addf %185, %187 : vector<1x128xf32>
    %189 = vector.broadcast %45 : f32 to vector<1x128xf32>
    %190 = arith.mulf %172, %189 : vector<1x128xf32>
    %191 = arith.addf %188, %190 : vector<1x128xf32>
    %c0_13 = arith.constant 0 : index
    %192 = arith.index_cast %52 : i32 to index
    %c0_14 = arith.constant 0 : index
    %193 = vector.load %arg3[%c0_13, %192, %c0_14] : memref<3x1x128xf32, #tpu.memory_space<vmem>>, vector<1x1x128xf32>
    %194 = vector.shape_cast %193 : vector<1x1x128xf32> to vector<1x128xf32>
    %195 = vector.shape_cast %191 : vector<1x128xf32> to vector<1x1x128xf32>
    tpu.vector_store %arg3[%c0_13, %192, %c0_14], %195 {strides = array<i32>} : memref<3x1x128xf32, #tpu.memory_space<vmem>>, vector<1x1x128xf32>,
    %196 = vector.broadcast %31 : f32 to vector<1x128xf32>
    %197 = arith.mulf %82, %196 : vector<1x128xf32>
    %198 = vector.broadcast %49 : f32 to vector<1x128xf32>
    %199 = arith.addf %197, %198 : vector<1x128xf32>
    %200 = vector.broadcast %34 : f32 to vector<1x128xf32>
    %201 = arith.mulf %100, %200 : vector<1x128xf32>
    %202 = arith.addf %199, %201 : vector<1x128xf32>
    %203 = vector.broadcast %37 : f32 to vector<1x128xf32>
    %204 = arith.mulf %118, %203 : vector<1x128xf32>
    %205 = arith.addf %202, %204 : vector<1x128xf32>
    %206 = vector.broadcast %40 : f32 to vector<1x128xf32>
    %207 = arith.mulf %136, %206 : vector<1x128xf32>
    %208 = arith.addf %205, %207 : vector<1x128xf32>
    %209 = vector.broadcast %43 : f32 to vector<1x128xf32>
    %210 = arith.mulf %154, %209 : vector<1x128xf32>
    %211 = arith.addf %208, %210 : vector<1x128xf32>
    %212 = vector.broadcast %46 : f32 to vector<1x128xf32>
    %213 = arith.mulf %172, %212 : vector<1x128xf32>
    %214 = arith.addf %211, %213 : vector<1x128xf32>
    %c1_15 = arith.constant 1 : index
    %215 = arith.index_cast %52 : i32 to index
    %c0_16 = arith.constant 0 : index
    %216 = vector.load %arg3[%c1_15, %215, %c0_16] : memref<3x1x128xf32, #tpu.memory_space<vmem>>, vector<1x1x128xf32>
    %217 = vector.shape_cast %216 : vector<1x1x128xf32> to vector<1x128xf32>
    %218 = vector.shape_cast %214 : vector<1x128xf32> to vector<1x1x128xf32>
    tpu.vector_store %arg3[%c1_15, %215, %c0_16], %218 {strides = array<i32>} : memref<3x1x128xf32, #tpu.memory_space<vmem>>, vector<1x1x128xf32>,
    %219 = vector.broadcast %32 : f32 to vector<1x128xf32>
    %220 = arith.mulf %82, %219 : vector<1x128xf32>
    %221 = vector.broadcast %50 : f32 to vector<1x128xf32>
    %222 = arith.addf %220, %221 : vector<1x128xf32>
    %223 = vector.broadcast %35 : f32 to vector<1x128xf32>
    %224 = arith.mulf %100, %223 : vector<1x128xf32>
    %225 = arith.addf %222, %224 : vector<1x128xf32>
    %226 = vector.broadcast %38 : f32 to vector<1x128xf32>
    %227 = arith.mulf %118, %226 : vector<1x128xf32>
    %228 = arith.addf %225, %227 : vector<1x128xf32>
    %229 = vector.broadcast %41 : f32 to vector<1x128xf32>
    %230 = arith.mulf %136, %229 : vector<1x128xf32>
    %231 = arith.addf %228, %230 : vector<1x128xf32>
    %232 = vector.broadcast %44 : f32 to vector<1x128xf32>
    %233 = arith.mulf %154, %232 : vector<1x128xf32>
    %234 = arith.addf %231, %233 : vector<1x128xf32>
    %235 = vector.broadcast %47 : f32 to vector<1x128xf32>
    %236 = arith.mulf %172, %235 : vector<1x128xf32>
    %237 = arith.addf %234, %236 : vector<1x128xf32>
    %c2_17 = arith.constant 2 : index
    %238 = arith.index_cast %52 : i32 to index
    %c0_18 = arith.constant 0 : index
    %239 = vector.load %arg3[%c2_17, %238, %c0_18] : memref<3x1x128xf32, #tpu.memory_space<vmem>>, vector<1x1x128xf32>
    %240 = vector.shape_cast %239 : vector<1x1x128xf32> to vector<1x128xf32>
    %241 = vector.shape_cast %237 : vector<1x128xf32> to vector<1x1x128xf32>
    tpu.vector_store %arg3[%c2_17, %238, %c0_18], %241 {strides = array<i32>} : memref<3x1x128xf32, #tpu.memory_space<vmem>>, vector<1x1x128xf32>,
    %c1_i32_19 = arith.constant 1 : i32
    return
  }
  func.func @transform_0(%arg0: i32) -> i32 {
    %c0_i32 = arith.constant 0 : i32
    %c0_i32_0 = arith.constant 0 : i32
    return %c0_i32 : i32
  }
  func.func @transform_1(%arg0: i32) -> (i32, i32, i32) {
    %c0_i32 = arith.constant 0 : i32
    %c0_i32_0 = arith.constant 0 : i32
    %c0_i32_1 = arith.constant 0 : i32
    return %c0_i32, %arg0, %c0_i32_0 : i32, i32, i32
  }
  func.func @transform_2(%arg0: i32) -> (i32, i32, i32) {
    %c0_i32 = arith.constant 0 : i32
    %c0_i32_0 = arith.constant 0 : i32
    %c0_i32_1 = arith.constant 0 : i32
    return %c0_i32, %arg0, %c0_i32_0 : i32, i32, i32
  }
}

</mosaic_0001>

<llo_original>
// kernel: lris_forward.1
$region0: #{lris_forward.1}
  #allocation0 [shape = 'u32[]', space=smem, size = 0x4, offset = 0x4, fixed_abs, tag = 'smem constant byte address 0x4 - core index']
  #allocation1 [shape = 'u32[144,128]{1,0:T(1,128)}', space=vmem, size = 0x12000, scoped, tag = 'internal scratch']
  %s0 = inlined_call_operand.vmem [shape: f32[64], index: 0, kind: input, shape index: {}]
  %s1 = inlined_call_operand.vmem [shape: f32[4,1,128], index: 1, kind: input, shape index: {}]
  %s2 = inlined_call_operand.vmem [shape: f32[3,1,128], index: 2, kind: output, shape index: {}]
  %s3 = sld [smem:[#allocation0]]
  $region22: #{lris_forward.1} parent=0
    _
  %s5 = ssub.s32 1, %s3
  %s6 = scalar_select 0, %s5, %s3
  $region1: #{lris_forward.1} parent=0
    #allocation2 [shape = 'u8[512]{0}', space=smem, size = 0x200, scoped, tag = 'input window, operand 0, single buffered']
    #allocation3 [shape = 's32[1]{0}', space=sflag, size = 0x4, scoped, tag = 'scoped memory for lris_forward.1']
    %7 = vsyncpa [#allocation3], 0
    // Predicated region
    $region2: #{lris_forward.1} parent=1 // pred_check
      _
    $region3: #{lris_forward.1} parent=1 // pred_check_branch
      %9 = sbr.rel (0) target = $region5
    $region4: #{lris_forward.1} parent=1 // pred_region
      %s11 = ssub.s32 16, 16
      %12 = vsyncadd [#allocation3], %s11
      %s14 = sshll.u32 %s0, 4
      %s15 = int_to_ptr.vmem [resolvable:$true] %s14
      %17 = dma.vmem_to_smem %s15, 16, [#allocation2], [#allocation3]
    $region5: #{lris_forward.1} parent=1 // pred_fallthru
      _
    // Predicated region
    $region6: #{lris_forward.1} parent=1 // pred_check
      _
    $region7: #{lris_forward.1} parent=1 // pred_check_branch
      %19 = sbr.rel (0) target = $region9
    $region8: #{lris_forward.1} parent=1 // pred_region
      _
    $region9: #{lris_forward.1} parent=1 // pred_fallthru
      _
    // Predicated region
    $region10: #{lris_forward.1} parent=1 // pred_check
      _
    $region11: #{lris_forward.1} parent=1 // pred_check_branch
      %21 = sbr.rel (0) target = $region13
    $region12: #{lris_forward.1} parent=1 // pred_region
      %22 = dma.done [#allocation3], 16
    $region13: #{lris_forward.1} parent=1 // pred_fallthru
      _
    %23 = sfence
    %s24 = sld [smem:[#allocation2]]
    %s25 = sld [smem:[#allocation2 + $0x1]]
    %s26 = sld [smem:[#allocation2 + $0x2]]
    %s27 = sld [smem:[#allocation2 + $0x3]]
    %s28 = sld [smem:[#allocation2 + $0x4]]
    %s29 = sld [smem:[#allocation2 + $0x5]]
    %s30 = sld [smem:[#allocation2 + $0x6]]
    %s31 = sld [smem:[#allocation2 + $0x7]]
    %s32 = sld [smem:[#allocation2 + $0x8]]
    %s33 = sld [smem:[#allocation2 + $0x9]]
    %s34 = sld [smem:[#allocation2 + $0xa]]
    %s35 = sld [smem:[#allocation2 + $0xb]]
    %s36 = sld [smem:[#allocation2 + $0xc]]
    %s37 = sld [smem:[#allocation2 + $0xd]]
    %s38 = sld [smem:[#allocation2 + $0xe]]
    %s39 = sld [smem:[#allocation2 + $0xf]]
    %s40 = sld [smem:[#allocation2 + $0x10]]
    %s41 = sld [smem:[#allocation2 + $0x11]]
    %s42 = sld [smem:[#allocation2 + $0x12]]
    %s43 = sld [smem:[#allocation2 + $0x13]]
    %s44 = sld [smem:[#allocation2 + $0x14]]
    %s45 = sld [smem:[#allocation2 + $0x15]]
    %s46 = sld [smem:[#allocation2 + $0x16]]
    %s47 = sld [smem:[#allocation2 + $0x17]]
    %s48 = sld [smem:[#allocation2 + $0x18]]
    %s49 = sld [smem:[#allocation2 + $0x19]]
    %s50 = sld [smem:[#allocation2 + $0x1a]]
    %s51 = sld [smem:[#allocation2 + $0x1b]]
    %s52 = sld [smem:[#allocation2 + $0x1c]]
    %s53 = sld [smem:[#allocation2 + $0x1d]]
    %s54 = sld [smem:[#allocation2 + $0x1e]]
    %s55 = sld [smem:[#allocation2 + $0x1f]]
    %s56 = sld [smem:[#allocation2 + $0x20]]
    %s57 = sld [smem:[#allocation2 + $0x21]]
    %s58 = sld [smem:[#allocation2 + $0x22]]
    %s59 = sld [smem:[#allocation2 + $0x23]]
    %s60 = sld [smem:[#allocation2 + $0x24]]
    %s61 = sld [smem:[#allocation2 + $0x25]]
    %s62 = sld [smem:[#allocation2 + $0x26]]
    %s63 = sld [smem:[#allocation2 + $0x27]]
    %s64 = sld [smem:[#allocation2 + $0x28]]
    %s65 = sld [smem:[#allocation2 + $0x29]]
    %s66 = sld [smem:[#allocation2 + $0x2a]]
    %s67 = sld [smem:[#allocation2 + $0x2b]]
    %s68 = sld [smem:[#allocation2 + $0x2c]]
    %s69 = sld [smem:[#allocation2 + $0x2d]]
    %s70 = sld [smem:[#allocation2 + $0x2e]]
    %s71 = sld [smem:[#allocation2 + $0x2f]]
    %s72 = sld [smem:[#allocation2 + $0x30]]
    %s73 = sld [smem:[#allocation2 + $0x31]]
    %s74 = sld [smem:[#allocation2 + $0x32]]
    %v75 = vld [vmem:[%s1] sm:$0x1]
    %s76 = sadd.s32 0, 1
    %s77 = scalar_lea.vmem %s1, %s76
    %v78 = vld [vmem:[%s77] sm:$0x1]
    %s79 = sadd.s32 0, 2
    %s80 = scalar_lea.vmem %s1, %s79
    %v81 = vld [vmem:[%s80] sm:$0x1]
    %s82 = sadd.s32 0, 3
    %s83 = scalar_lea.vmem %s1, %s82
    %v84 = vld [vmem:[%s83] sm:$0x1]
    %v85 = vstv %s24
    %v86 = vmul.f32 %v75, %v85
    %v87 = vstv %s48
    %v88 = vadd.f32 %v86, %v87
    %v89 = vstv %s30
    %v90 = vmul.f32 %v78, %v89
    %v91 = vadd.f32 %v88, %v90
    %v92 = vstv %s36
    %v93 = vmul.f32 %v81, %v92
    %v94 = vadd.f32 %v91, %v93
    %v95 = vstv %s42
    %v96 = vmul.f32 %v84, %v95
    %v97 = vadd.f32 %v94, %v96
    %v98 = vxor.u32 %v97, 2147483648
    %v99 = vmul.f32 %v98, 1.442695
    %v100 = vpow.pop %v99
    %v101 = vadd.f32 %v100, 1.0
    %v102 = vrcp.pop %v101
    %v103 = vmul.f32 1.0, %v102
    %v104 = vstv %s25
    %v105 = vmul.f32 %v75, %v104
    %v106 = vstv %s49
    %v107 = vadd.f32 %v105, %v106
    %v108 = vstv %s31
    %v109 = vmul.f32 %v78, %v108
    %v110 = vadd.f32 %v107, %v109
    %v111 = vstv %s37
    %v112 = vmul.f32 %v81, %v111
    %v113 = vadd.f32 %v110, %v112
    %v114 = vstv %s43
    %v115 = vmul.f32 %v84, %v114
    %v116 = vadd.f32 %v113, %v115
    %v117 = vxor.u32 %v116, 2147483648
    %v118 = vmul.f32 %v117, 1.442695
    %v119 = vpow.pop %v118
    %v120 = vadd.f32 %v119, 1.0
    %v121 = vrcp.pop %v120
    %v122 = vmul.f32 1.0, %v121
    %v123 = vstv %s26
    %v124 = vmul.f32 %v75, %v123
    %v125 = vstv %s50
    %v126 = vadd.f32 %v124, %v125
    %v127 = vstv %s32
    %v128 = vmul.f32 %v78, %v127
    %v129 = vadd.f32 %v126, %v128
    %v130 = vstv %s38
    %v131 = vmul.f32 %v81, %v130
    %v132 = vadd.f32 %v129, %v131
    %v133 = vstv %s44
    %v134 = vmul.f32 %v84, %v133
    %v135 = vadd.f32 %v132, %v134
    %v136 = vxor.u32 %v135, 2147483648
    %v137 = vmul.f32 %v136, 1.442695
    %v138 = vpow.pop %v137
    %v139 = vadd.f32 %v138, 1.0
    %v140 = vrcp.pop %v139
    %v141 = vmul.f32 1.0, %v140
    %v142 = vstv %s27
    %v143 = vmul.f32 %v75, %v142
    %v144 = vstv %s51
    %v145 = vadd.f32 %v143, %v144
    %v146 = vstv %s33
    %v147 = vmul.f32 %v78, %v146
    %v148 = vadd.f32 %v145, %v147
    %v149 = vstv %s39
    %v150 = vmul.f32 %v81, %v149
    %v151 = vadd.f32 %v148, %v150
    %v152 = vstv %s45
    %v153 = vmul.f32 %v84, %v152
    %v154 = vadd.f32 %v151, %v153
    %v155 = vxor.u32 %v154, 2147483648
    %v156 = vmul.f32 %v155, 1.442695
    %v157 = vpow.pop %v156
    %v158 = vadd.f32 %v157, 1.0
    %v159 = vrcp.pop %v158
    %v160 = vmul.f32 1.0, %v159
    %v161 = vstv %s28
    %v162 = vmul.f32 %v75, %v161
    %v163 = vstv %s52
    %v164 = vadd.f32 %v162, %v163
    %v165 = vstv %s34
    %v166 = vmul.f32 %v78, %v165
    %v167 = vadd.f32 %v164, %v166
    %v168 = vstv %s40
    %v169 = vmul.f32 %v81, %v168
    %v170 = vadd.f32 %v167, %v169
    %v171 = vstv %s46
    %v172 = vmul.f32 %v84, %v171
    %v173 = vadd.f32 %v170, %v172
    %v174 = vxor.u32 %v173, 2147483648
    %v175 = vmul.f32 %v174, 1.442695
    %v176 = vpow.pop %v175
    %v177 = vadd.f32 %v176, 1.0
    %v178 = vrcp.pop %v177
    %v179 = vmul.f32 1.0, %v178
    %v180 = vstv %s29
    %v181 = vmul.f32 %v75, %v180
    %v182 = vstv %s53
    %v183 = vadd.f32 %v181, %v182
    %v184 = vstv %s35
    %v185 = vmul.f32 %v78, %v184
    %v186 = vadd.f32 %v183, %v185
    %v187 = vstv %s41
    %v188 = vmul.f32 %v81, %v187
    %v189 = vadd.f32 %v186, %v188
    %v190 = vstv %s47
    %v191 = vmul.f32 %v84, %v190
    %v192 = vadd.f32 %v189, %v191
    %v193 = vxor.u32 %v192, 2147483648
    %v194 = vmul.f32 %v193, 1.442695
    %v195 = vpow.pop %v194
    %v196 = vadd.f32 %v195, 1.0
    %v197 = vrcp.pop %v196
    %v198 = vmul.f32 1.0, %v197
    %v199 = vstv %s54
    %v200 = vmul.f32 %v103, %v199
    %v201 = vstv %s72
    %v202 = vadd.f32 %v200, %v201
    %v203 = vstv %s57
    %v204 = vmul.f32 %v122, %v203
    %v205 = vadd.f32 %v202, %v204
    %v206 = vstv %s60
    %v207 = vmul.f32 %v141, %v206
    %v208 = vadd.f32 %v205, %v207
    %v209 = vstv %s63
    %v210 = vmul.f32 %v160, %v209
    %v211 = vadd.f32 %v208, %v210
    %v212 = vstv %s66
    %v213 = vmul.f32 %v179, %v212
    %v214 = vadd.f32 %v211, %v213
    %v215 = vstv %s69
    %v216 = vmul.f32 %v198, %v215
    %v217 = vadd.f32 %v214, %v216
    %218 = vst [vmem:[%s2] sm:$0x1] %v217
    %v219 = vstv %s55
    %v220 = vmul.f32 %v103, %v219
    %v221 = vstv %s73
    %v222 = vadd.f32 %v220, %v221
    %v223 = vstv %s58
    %v224 = vmul.f32 %v122, %v223
    %v225 = vadd.f32 %v222, %v224
    %v226 = vstv %s61
    %v227 = vmul.f32 %v141, %v226
    %v228 = vadd.f32 %v225, %v227
    %v229 = vstv %s64
    %v230 = vmul.f32 %v160, %v229
    %v231 = vadd.f32 %v228, %v230
    %v232 = vstv %s67
    %v233 = vmul.f32 %v179, %v232
    %v234 = vadd.f32 %v231, %v233
    %v235 = vstv %s70
    %v236 = vmul.f32 %v198, %v235
    %v237 = vadd.f32 %v234, %v236
    %s238 = scalar_lea.vmem %s2, %s76
    %239 = vst [vmem:[%s238] sm:$0x1] %v237
    %v240 = vstv %s56
    %v241 = vmul.f32 %v103, %v240
    %v242 = vstv %s74
    %v243 = vadd.f32 %v241, %v242
    %v244 = vstv %s59
    %v245 = vmul.f32 %v122, %v244
    %v246 = vadd.f32 %v243, %v245
    %v247 = vstv %s62
    %v248 = vmul.f32 %v141, %v247
    %v249 = vadd.f32 %v246, %v248
    %v250 = vstv %s65
    %v251 = vmul.f32 %v160, %v250
    %v252 = vadd.f32 %v249, %v251
    %v253 = vstv %s68
    %v254 = vmul.f32 %v179, %v253
    %v255 = vadd.f32 %v252, %v254
    %v256 = vstv %s71
    %v257 = vmul.f32 %v198, %v256
    %v258 = vadd.f32 %v255, %v257
    %s259 = scalar_lea.vmem %s2, %s79
    %260 = vst [vmem:[%s259] sm:$0x1] %v258
    // Predicated region
    $region14: #{lris_forward.1} parent=1 // pred_check
      _
    $region15: #{lris_forward.1} parent=1 // pred_check_branch
      %262 = sbr.rel (0) target = $region17
    $region16: #{lris_forward.1} parent=1 // pred_region
      _
    $region17: #{lris_forward.1} parent=1 // pred_fallthru
      _
    // Predicated region
    $region18: #{lris_forward.1} parent=1 // pred_check
      _
    $region19: #{lris_forward.1} parent=1 // pred_check_branch
      %264 = sbr.rel (0) target = $region21
    $region20: #{lris_forward.1} parent=1 // pred_region
      _
    $region21: #{lris_forward.1} parent=1 // pred_fallthru
      _
    %265 = vsyncpa [#allocation3], 1

</llo_original>
